<compile_context>
chip_gen: v5e
topology: v5e:2x2
jax: 0.10.0
libtpu: 0.0.40
codegen_flags: <defaults>
</compile_context>

<pallas_src>
import jax
import jax.numpy as jnp
from jax.experimental import pallas as pl
from jax.experimental.pallas import tpu as pltpu

FEATURE_SIZE = 64
INPUT_SIZE = 2 * FEATURE_SIZE          # 128
H1, H2 = 256, 128
BN_EPS = 1e-5
LEAKY_SLOPE = 0.01                     # nn.LeakyReLU default

# Packed small-parameter slab layout (all offsets are multiples of 128 lanes).
_OFF_B1, _OFF_G1, _OFF_BE1 = 0, H1, 2 * H1                         # 0, 256, 512
_OFF_B2, _OFF_G2, _OFF_BE2 = 3 * H1, 3 * H1 + H2, 3 * H1 + 2 * H2  # 768, 896, 1024
_OFF_W3 = 3 * H1 + 3 * H2                                          # 1152
_OFF_B3 = _OFF_W3 + H2                                             # 1280
PACK_WIDTH = _OFF_B3 + 1                                           # 1281

_TRANS_B = (((1,), (1,)), ((), ()))    # contract last dims: A @ B^T


def _round_up(n, m):
    return ((n + m - 1) // m) * m


def _vmem_capacity_bytes():
    try:
        info = pltpu.get_tpu_info()
        cap = getattr(info, "vmem_capacity_bytes", None)
        if cap:
            return int(cap)
    except Exception:
        pass
    return 64 * 1024 * 1024            # conservative default (v7x-sized VMEM)


def _unpack(pk_ref):
    b1 = pk_ref[:, _OFF_B1:_OFF_B1 + H1]
    g1 = pk_ref[:, _OFF_G1:_OFF_G1 + H1]
    be1 = pk_ref[:, _OFF_BE1:_OFF_BE1 + H1]
    b2 = pk_ref[:, _OFF_B2:_OFF_B2 + H2]
    g2 = pk_ref[:, _OFF_G2:_OFF_G2 + H2]
    be2 = pk_ref[:, _OFF_BE2:_OFF_BE2 + H2]
    w3r = pk_ref[:, _OFF_W3:_OFF_W3 + H2]
    b3 = pk_ref[:, _OFF_B3:_OFF_B3 + 1]
    return b1, g1, be1, b2, g2, be2, w3r, b3


def _bn_leaky(h, col_sum, col_sumsq, gamma, beta, inv_n):
    """BatchNorm1d (training mode, biased var) folded into per-column scale/shift,
    fused with LeakyReLU (max(y, slope*y)).  One-pass variance clamped at 0."""
    mean = col_sum * inv_n
    var = jnp.maximum(col_sumsq * inv_n - mean * mean, 0.0)
    scale = gamma * jax.lax.rsqrt(var + BN_EPS)
    shift = beta - mean * scale
    y = h * scale + shift
    return jnp.maximum(y, LEAKY_SLOPE * y)


def _stats(h):
    """Unmasked column sum / sum-of-squares (VPU axis-0 reduction)."""
    return (jnp.sum(h, axis=0, keepdims=True),
            jnp.sum(h * h, axis=0, keepdims=True))


def _masked_stats(h, mask_col):
    """Column sum / sum-of-squares over valid rows only, on the VPU (axis-0 vreg adds)
    instead of an M=1 MXU dot — keeps the vex/MXU slot for the real GEMMs."""
    hm = h * mask_col
    return (jnp.sum(hm, axis=0, keepdims=True),
            jnp.sum(hm * h, axis=0, keepdims=True))


def _row_mask_col(tile_idx, tile_rows, batch):
    """(tile_rows, 1) f32 row-validity mask so padded batch rows never pollute BN stats."""
    rows = tile_idx * tile_rows + jax.lax.broadcasted_iota(
        jnp.int32, (tile_rows, 1), 0)
    return (rows < batch).astype(jnp.float32)


def _out_row(h2, w3r, b3):
    """Final Linear(128 -> 1) emitted lane-dense as (1, rows): w3_row @ h2^T on the MXU."""
    out = jax.lax.dot_general(w3r, h2, _TRANS_B,
                              preferred_element_type=jnp.float32)
    return out + b3


def _make_fused_kernel(batch):
    """Whole batch in one block: single fused invocation, no padding, no masking."""
    inv_n = 1.0 / float(batch)

    def kernel(x_ref, w1_ref, w2_ref, pk_ref, o_ref):
        b1, g1, be1, b2, g2, be2, w3r, b3 = _unpack(pk_ref)

        h1p = jnp.dot(x_ref[...], w1_ref[...],
                      preferred_element_type=jnp.float32) + b1
        s1, q1 = _stats(h1p)
        h1 = _bn_leaky(h1p, s1, q1, g1, be1, inv_n)

        h2p = jnp.dot(h1.astype(w2_ref.dtype), w2_ref[...],
                      preferred_element_type=jnp.float32) + b2
        s2, q2 = _stats(h2p)
        h2 = _bn_leaky(h2p, s2, q2, g2, be2, inv_n)

        o_ref[...] = _out_row(h2, w3r, b3).astype(o_ref.dtype)

    return kernel


def _make_tiled_cached_kernel(batch, tile_rows):
    """grid = (3 passes, batch tiles); h1p/h2p cached in VMEM so every GEMM runs once."""
    inv_n = 1.0 / float(batch)

    def kernel(x_ref, w1_ref, w2_ref, pk_ref, o_ref,
               h1c_ref, h2c_ref, s1_ref, q1_ref, s2_ref, q2_ref):
        p = pl.program_id(0)   # 0: L1 GEMM + stats, 1: L2 GEMM + stats, 2: emit
        t = pl.program_id(1)   # batch tile

        b1, g1, be1, b2, g2, be2, w3r, b3 = _unpack(pk_ref)
        mask_col = _row_mask_col(t, tile_rows, batch)

        @pl.when(jnp.logical_and(p == 0, t == 0))
        def _init():
            s1_ref[...] = jnp.zeros_like(s1_ref)
            q1_ref[...] = jnp.zeros_like(q1_ref)
            s2_ref[...] = jnp.zeros_like(s2_ref)
            q2_ref[...] = jnp.zeros_like(q2_ref)

        @pl.when(p == 0)
        def _pass0():   # layer-1 GEMM, accumulate BN stats, cache h1p
            h1p = jnp.dot(x_ref[...], w1_ref[...],
                          preferred_element_type=jnp.float32) + b1
            s, q = _masked_stats(h1p, mask_col)
            s1_ref[...] += s
            q1_ref[...] += q
            h1c_ref[t] = h1p

        @pl.when(p == 1)
        def _pass1():   # normalize cached h1p, layer-2 GEMM, stats, cache h2p
            h1 = _bn_leaky(h1c_ref[t], s1_ref[...], q1_ref[...], g1, be1, inv_n)
            h2p = jnp.dot(h1.astype(w2_ref.dtype), w2_ref[...],
                          preferred_element_type=jnp.float32) + b2
            s, q = _masked_stats(h2p, mask_col)
            s2_ref[...] += s
            q2_ref[...] += q
            h2c_ref[t] = h2p

        @pl.when(p == 2)
        def _pass2():   # normalize cached h2p, emit lane-dense output row
            h2 = _bn_leaky(h2c_ref[t], s2_ref[...], q2_ref[...], g2, be2, inv_n)
            o_ref[...] = _out_row(h2, w3r, b3).astype(o_ref.dtype)

    return kernel


def _make_tiled_recompute_kernel(batch, tile_rows):
    """Fallback when the h1p/h2p cache does not fit VMEM: recompute across passes."""
    inv_n = 1.0 / float(batch)

    def kernel(x_ref, w1_ref, w2_ref, pk_ref, o_ref,
               s1_ref, q1_ref, s2_ref, q2_ref):
        p = pl.program_id(0)
        t = pl.program_id(1)

        b1, g1, be1, b2, g2, be2, w3r, b3 = _unpack(pk_ref)
        mask_col = _row_mask_col(t, tile_rows, batch)

        def layer1_pre():
            return jnp.dot(x_ref[...], w1_ref[...],
                           preferred_element_type=jnp.float32) + b1

        def layer2_pre(h1):
            return jnp.dot(h1.astype(w2_ref.dtype), w2_ref[...],
                           preferred_element_type=jnp.float32) + b2

        @pl.when(jnp.logical_and(p == 0, t == 0))
        def _init():
            s1_ref[...] = jnp.zeros_like(s1_ref)
            q1_ref[...] = jnp.zeros_like(q1_ref)
            s2_ref[...] = jnp.zeros_like(s2_ref)
            q2_ref[...] = jnp.zeros_like(q2_ref)

        @pl.when(p == 0)
        def _pass0():
            h1p = layer1_pre()
            s, q = _masked_stats(h1p, mask_col)
            s1_ref[...] += s
            q1_ref[...] += q

        @pl.when(p == 1)
        def _pass1():
            h1 = _bn_leaky(layer1_pre(), s1_ref[...], q1_ref[...], g1, be1, inv_n)
            h2p = layer2_pre(h1)
            s, q = _masked_stats(h2p, mask_col)
            s2_ref[...] += s
            q2_ref[...] += q

        @pl.when(p == 2)
        def _pass2():
            h1 = _bn_leaky(layer1_pre(), s1_ref[...], q1_ref[...], g1, be1, inv_n)
            h2 = _bn_leaky(layer2_pre(h1), s2_ref[...], q2_ref[...], g2, be2, inv_n)
            o_ref[...] = _out_row(h2, w3r, b3).astype(o_ref.dtype)

    return kernel


def pack_small_params(params):
    w3_row = params["w3"].reshape(1, H2)
    return jnp.concatenate(
        [params["b1"], params["g1"], params["be1"],
         params["b2"], params["g2"], params["be2"],
         w3_row, params["b3"]], axis=1).astype(jnp.float32)


def relation_head2_forward(x, params, *, block_rows=1024, use_bf16_gemm=False,
                           max_fused_rows=None, allow_intermediate_cache=True):
    """RelationHead2 forward; BatchNorm in training mode over the rows of x."""
    batch, in_dim = x.shape
    assert in_dim == INPUT_SIZE, f"expected {INPUT_SIZE} input features, got {in_dim}"

    # Generation-aware VMEM budgets (v5e/v6e: 128 MiB physical, v7x: 64 MiB).
    vmem_cap = _vmem_capacity_bytes()
    big_vmem = vmem_cap >= 96 * 1024 * 1024
    vmem_limit = (100 if big_vmem else 48) * 1024 * 1024
    if max_fused_rows is None:
        max_fused_rows = 4096 if big_vmem else 2048

    gemm_dtype = jnp.bfloat16 if use_bf16_gemm else jnp.float32
    xg = x.astype(gemm_dtype)
    w1 = params["w1"].astype(gemm_dtype)
    w2 = params["w2"].astype(gemm_dtype)
    pk = pack_small_params(params)

    # ---------------- single fused block ----------------
    if batch <= max_fused_rows:
        vmem = pl.BlockSpec(memory_space=pltpu.MemorySpace.VMEM)
        out = pl.pallas_call(
            _make_fused_kernel(batch),
            out_shape=jax.ShapeDtypeStruct((1, batch), jnp.float32),
            in_specs=[vmem, vmem, vmem, vmem],
            out_specs=vmem,
            compiler_params=pltpu.CompilerParams(vmem_limit_bytes=vmem_limit),
        )(xg, w1, w2, pk)
        return out.reshape(batch, 1)

    # ---------------- tiled 3-pass path ----------------
    tile_rows = max(128, _round_up(min(block_rows, batch), 128))
    padded = _round_up(batch, tile_rows)
    if padded != batch:
        xg = jnp.pad(xg, ((0, padded - batch), (0, 0)))
    num_tiles = padded // tile_rows

    cache_bytes = padded * (H1 + H2) * 4          # f32 h1p + h2p per row
    use_cache = (allow_intermediate_cache
                 and cache_bytes <= vmem_limit - 16 * 1024 * 1024)

    w1_spec = pl.BlockSpec((INPUT_SIZE, H1), lambda p, t: (0, 0))   # resident weights
    w2_spec = pl.BlockSpec((H1, H2), lambda p, t: (0, 0))           # resident weights
    pk_spec = pl.BlockSpec((1, PACK_WIDTH), lambda p, t: (0, 0))    # resident params
    # Output is only written in pass 2: pin the block index for earlier passes so
    # uninitialized VMEM is never flushed back to HBM.
    out_spec = pl.BlockSpec((1, tile_rows),
                            lambda p, t: (0, jnp.where(p == 2, t, 0)))

    stat_scratch = [
        pltpu.VMEM((1, H1), jnp.float32), pltpu.VMEM((1, H1), jnp.float32),
        pltpu.VMEM((1, H2), jnp.float32), pltpu.VMEM((1, H2), jnp.float32),
    ]

    if use_cache:
        kernel = _make_tiled_cached_kernel(batch, tile_rows)
        # x is only consumed in pass 0 -> gate its index_map so HBM reads it once.
        x_spec = pl.BlockSpec((tile_rows, INPUT_SIZE),
                              lambda p, t: (jnp.where(p == 0, t, 0), 0))
        scratch = [pltpu.VMEM((num_tiles, tile_rows, H1), jnp.float32),
                   pltpu.VMEM((num_tiles, tile_rows, H2), jnp.float32)] + stat_scratch
    else:
        kernel = _make_tiled_recompute_kernel(batch, tile_rows)
        x_spec = pl.BlockSpec((tile_rows, INPUT_SIZE), lambda p, t: (t, 0))
        scratch = stat_scratch

    grid_spec = pltpu.PrefetchScalarGridSpec(
        num_scalar_prefetch=0,
        grid=(3, num_tiles),
        in_specs=[x_spec, w1_spec, w2_spec, pk_spec],
        out_specs=out_spec,
        scratch_shapes=scratch,
    )
    # BN training stats couple all batch tiles -> both grid axes stay serial.
    # TODO(synk): v7x megacore split with per-core partial BN sums + cross-core combine.
    out = pl.pallas_call(
        kernel,
        out_shape=jax.ShapeDtypeStruct((1, padded), jnp.float32),
        grid_spec=grid_spec,
        compiler_params=pltpu.CompilerParams(
            dimension_semantics=("arbitrary", "arbitrary"),
            vmem_limit_bytes=vmem_limit),
    )(xg, w1, w2, pk)
    return out[0, :batch].reshape(batch, 1)


def init_params(key):
    """PyTorch defaults: Linear U(-1/sqrt(fan_in), +), BN weight=1, bias=0.
    Linear weights stored pre-transposed as (in, out)."""
    ks = jax.random.split(key, 6)

    def linear(kw, kb, fan_in, fan_out):
        bound = 1.0 / (fan_in ** 0.5)
        w = jax.random.uniform(kw, (fan_in, fan_out), jnp.float32, -bound, bound)
        b = jax.random.uniform(kb, (1, fan_out), jnp.float32, -bound, bound)
        return w, b

    w1, b1 = linear(ks[0], ks[1], INPUT_SIZE, H1)
    w2, b2 = linear(ks[2], ks[3], H1, H2)
    w3, b3 = linear(ks[4], ks[5], H2, 1)          # w3: (128, 1), b3: (1, 1)
    return {
        "w1": w1, "b1": b1,
        "g1": jnp.ones((1, H1), jnp.float32), "be1": jnp.zeros((1, H1), jnp.float32),
        "w2": w2, "b2": b2,
        "g2": jnp.ones((1, H2), jnp.float32), "be2": jnp.zeros((1, H2), jnp.float32),
        "w3": w3, "b3": b3,
    }


def reference_forward(x, p):
    """Pure-JAX reference with PyTorch training-mode BatchNorm semantics."""
    def bn(h, g, be):
        m = jnp.mean(h, axis=0, keepdims=True)
        v = jnp.mean((h - m) ** 2, axis=0, keepdims=True)
        return (h - m) * jax.lax.rsqrt(v + BN_EPS) * g + be

    def lrelu(h):
        return jnp.where(h >= 0, h, LEAKY_SLOPE * h)

    h = lrelu(bn(x @ p["w1"] + p["b1"], p["g1"], p["be1"]))
    h = lrelu(bn(h @ p["w2"] + p["b2"], p["g2"], p["be2"]))
    return h @ p["w3"] + p["b3"]


if __name__ == "__main__":
    key = jax.random.PRNGKey(0)
    k_p, k_x = jax.random.split(key)
    params = init_params(k_p)

    tests = [
        # (batch, kwargs, abs tolerance)
        (8, {}, 1e-3),                                                   # fused single block
        (200, dict(block_rows=128, max_fused_rows=64), 1e-3),            # tiled + VMEM cache
        (200, dict(block_rows=128, max_fused_rows=64,
                   allow_intermediate_cache=False), 1e-3),               # tiled recompute fallback
        (200, dict(block_rows=128, max_fused_rows=64,
                   use_bf16_gemm=True), 1e-1),                           # bf16 MXU operands
    ]

    for batch, kwargs, tol in tests:
        kx = jax.random.fold_in(k_x, batch)
        x = jax.random.normal(kx, (batch, INPUT_SIZE), dtype=jnp.float32)

        out = jax.block_until_ready(relation_head2_forward(x, params, **kwargs))
        ref = reference_forward(x, params)

        assert out.shape == (batch, 1), (out.shape, batch)
        err = float(jnp.max(jnp.abs(out - ref)))
        assert err < tol, f"mismatch batch={batch} kwargs={kwargs}: max_abs_err={err}"

    print("KERNEL_OK")
</pallas_src>

<mosaic_0001>
module attributes {stable_mosaic.version = 11 : i64} {
  func.func @kernel(%arg0: memref<8x128xf32, #tpu.memory_space<vmem>>, %arg1: memref<128x256xf32, #tpu.memory_space<vmem>>, %arg2: memref<256x128xf32, #tpu.memory_space<vmem>>, %arg3: memref<1x1281xf32, #tpu.memory_space<vmem>>, %arg4: memref<1x8xf32, #tpu.memory_space<vmem>>) attributes {dimension_semantics = [], scalar_prefetch = 0 : i64, scratch_operands = 0 : i64, tpu.core_type = #tpu.core_type<tc>} {
    %c0 = arith.constant 0 : index
    %c0_0 = arith.constant 0 : index
    %0 = vector.load %arg3[%c0, %c0_0] : memref<1x1281xf32, #tpu.memory_space<vmem>>, vector<1x256xf32>
    %c0_1 = arith.constant 0 : index
    %c256 = arith.constant 256 : index
    %1 = vector.load %arg3[%c0_1, %c256] : memref<1x1281xf32, #tpu.memory_space<vmem>>, vector<1x256xf32>
    %c0_2 = arith.constant 0 : index
    %c512 = arith.constant 512 : index
    %2 = vector.load %arg3[%c0_2, %c512] : memref<1x1281xf32, #tpu.memory_space<vmem>>, vector<1x256xf32>
    %c0_3 = arith.constant 0 : index
    %c768 = arith.constant 768 : index
    %3 = vector.load %arg3[%c0_3, %c768] : memref<1x1281xf32, #tpu.memory_space<vmem>>, vector<1x128xf32>
    %c0_4 = arith.constant 0 : index
    %c896 = arith.constant 896 : index
    %4 = vector.load %arg3[%c0_4, %c896] : memref<1x1281xf32, #tpu.memory_space<vmem>>, vector<1x128xf32>
    %c0_5 = arith.constant 0 : index
    %c1024 = arith.constant 1024 : index
    %5 = vector.load %arg3[%c0_5, %c1024] : memref<1x1281xf32, #tpu.memory_space<vmem>>, vector<1x128xf32>
    %c0_6 = arith.constant 0 : index
    %c1152 = arith.constant 1152 : index
    %6 = vector.load %arg3[%c0_6, %c1152] : memref<1x1281xf32, #tpu.memory_space<vmem>>, vector<1x128xf32>
    %c0_7 = arith.constant 0 : index
    %c1280 = arith.constant 1280 : index
    %7 = vector.load %arg3[%c0_7, %c1280] : memref<1x1281xf32, #tpu.memory_space<vmem>>, vector<1x1xf32>
    %c0_8 = arith.constant 0 : index
    %c0_9 = arith.constant 0 : index
    %8 = vector.load %arg0[%c0_8, %c0_9] : memref<8x128xf32, #tpu.memory_space<vmem>>, vector<8x128xf32>
    %c0_10 = arith.constant 0 : index
    %c0_11 = arith.constant 0 : index
    %9 = vector.load %arg1[%c0_10, %c0_11] : memref<128x256xf32, #tpu.memory_space<vmem>>, vector<128x256xf32>
    %cst = arith.constant dense<0.000000e+00> : vector<8x256xf32>
    %10 = tpu.matmul %8, %9, %cst {dimension_numbers = #tpu.dot_dimension_numbers<[1], [0], [0], [1], [0, 0, 1, 1], [], []>} : vector<8x128xf32>, vector<128x256xf32>, vector<8x256xf32> -> vector<8x256xf32>
    %11 = vector.broadcast %0 : vector<1x256xf32> to vector<8x256xf32>
    %12 = arith.addf %10, %11 : vector<8x256xf32>
    %cst_12 = arith.constant dense<0.000000e+00> : vector<256xf32>
    %13 = vector.multi_reduction <add>, %12, %cst_12 [0] : vector<8x256xf32> to vector<256xf32>
    %14 = vector.shape_cast %13 : vector<256xf32> to vector<1x256xf32>
    %15 = arith.mulf %12, %12 : vector<8x256xf32>
    %cst_13 = arith.constant dense<0.000000e+00> : vector<256xf32>
    %16 = vector.multi_reduction <add>, %15, %cst_13 [0] : vector<8x256xf32> to vector<256xf32>
    %17 = vector.shape_cast %16 : vector<256xf32> to vector<1x256xf32>
    %cst_14 = arith.constant 1.250000e-01 : f32
    %18 = vector.broadcast %cst_14 : f32 to vector<1x256xf32>
    %19 = arith.mulf %14, %18 : vector<1x256xf32>
    %cst_15 = arith.constant 1.250000e-01 : f32
    %20 = vector.broadcast %cst_15 : f32 to vector<1x256xf32>
    %21 = arith.mulf %17, %20 : vector<1x256xf32>
    %22 = arith.mulf %19, %19 : vector<1x256xf32>
    %23 = arith.subf %21, %22 : vector<1x256xf32>
    %cst_16 = arith.constant 0.000000e+00 : f32
    %24 = vector.broadcast %cst_16 : f32 to vector<1x256xf32>
    %25 = arith.maximumf %23, %24 : vector<1x256xf32>
    %cst_17 = arith.constant 9.99999974E-6 : f32
    %26 = vector.broadcast %cst_17 : f32 to vector<1x256xf32>
    %27 = arith.addf %25, %26 : vector<1x256xf32>
    %28 = math.rsqrt %27 : vector<1x256xf32>
    %29 = arith.mulf %1, %28 : vector<1x256xf32>
    %30 = arith.mulf %19, %29 : vector<1x256xf32>
    %31 = arith.subf %2, %30 : vector<1x256xf32>
    %32 = vector.broadcast %29 : vector<1x256xf32> to vector<8x256xf32>
    %33 = arith.mulf %12, %32 : vector<8x256xf32>
    %34 = vector.broadcast %31 : vector<1x256xf32> to vector<8x256xf32>
    %35 = arith.addf %33, %34 : vector<8x256xf32>
    %cst_18 = arith.constant 0.00999999977 : f32
    %36 = vector.broadcast %cst_18 : f32 to vector<8x256xf32>
    %37 = arith.mulf %36, %35 : vector<8x256xf32>
    %38 = arith.maximumf %35, %37 : vector<8x256xf32>
    %c0_19 = arith.constant 0 : index
    %c0_20 = arith.constant 0 : index
    %39 = vector.load %arg2[%c0_19, %c0_20] : memref<256x128xf32, #tpu.memory_space<vmem>>, vector<256x128xf32>
    %cst_21 = arith.constant dense<0.000000e+00> : vector<8x128xf32>
    %40 = tpu.matmul %38, %39, %cst_21 {dimension_numbers = #tpu.dot_dimension_numbers<[1], [0], [0], [1], [0, 0, 1, 1], [], []>} : vector<8x256xf32>, vector<256x128xf32>, vector<8x128xf32> -> vector<8x128xf32>
    %41 = vector.broadcast %3 : vector<1x128xf32> to vector<8x128xf32>
    %42 = arith.addf %40, %41 : vector<8x128xf32>
    %cst_22 = arith.constant dense<0.000000e+00> : vector<128xf32>
    %43 = vector.multi_reduction <add>, %42, %cst_22 [0] : vector<8x128xf32> to vector<128xf32>
    %44 = vector.shape_cast %43 : vector<128xf32> to vector<1x128xf32>
    %45 = arith.mulf %42, %42 : vector<8x128xf32>
    %cst_23 = arith.constant dense<0.000000e+00> : vector<128xf32>
    %46 = vector.multi_reduction <add>, %45, %cst_23 [0] : vector<8x128xf32> to vector<128xf32>
    %47 = vector.shape_cast %46 : vector<128xf32> to vector<1x128xf32>
    %cst_24 = arith.constant 1.250000e-01 : f32
    %48 = vector.broadcast %cst_24 : f32 to vector<1x128xf32>
    %49 = arith.mulf %44, %48 : vector<1x128xf32>
    %cst_25 = arith.constant 1.250000e-01 : f32
    %50 = vector.broadcast %cst_25 : f32 to vector<1x128xf32>
    %51 = arith.mulf %47, %50 : vector<1x128xf32>
    %52 = arith.mulf %49, %49 : vector<1x128xf32>
    %53 = arith.subf %51, %52 : vector<1x128xf32>
    %cst_26 = arith.constant 0.000000e+00 : f32
    %54 = vector.broadcast %cst_26 : f32 to vector<1x128xf32>
    %55 = arith.maximumf %53, %54 : vector<1x128xf32>
    %cst_27 = arith.constant 9.99999974E-6 : f32
    %56 = vector.broadcast %cst_27 : f32 to vector<1x128xf32>
    %57 = arith.addf %55, %56 : vector<1x128xf32>
    %58 = math.rsqrt %57 : vector<1x128xf32>
    %59 = arith.mulf %4, %58 : vector<1x128xf32>
    %60 = arith.mulf %49, %59 : vector<1x128xf32>
    %61 = arith.subf %5, %60 : vector<1x128xf32>
    %62 = vector.broadcast %59 : vector<1x128xf32> to vector<8x128xf32>
    %63 = arith.mulf %42, %62 : vector<8x128xf32>
    %64 = vector.broadcast %61 : vector<1x128xf32> to vector<8x128xf32>
    %65 = arith.addf %63, %64 : vector<8x128xf32>
    %cst_28 = arith.constant 0.00999999977 : f32
    %66 = vector.broadcast %cst_28 : f32 to vector<8x128xf32>
    %67 = arith.mulf %66, %65 : vector<8x128xf32>
    %68 = arith.maximumf %65, %67 : vector<8x128xf32>
    %cst_29 = arith.constant dense<0.000000e+00> : vector<1x8xf32>
    %69 = tpu.matmul %6, %68, %cst_29 {dimension_numbers = #tpu.dot_dimension_numbers<[1], [1], [0], [0], [0, 0, 1, 0], [], []>} : vector<1x128xf32>, vector<8x128xf32>, vector<1x8xf32> -> vector<1x8xf32>
    %70 = vector.broadcast %7 : vector<1x1xf32> to vector<1x8xf32>
    %71 = arith.addf %69, %70 : vector<1x8xf32>
    %c0_30 = arith.constant 0 : index
    %c0_31 = arith.constant 0 : index
    %72 = vector.load %arg4[%c0_30, %c0_31] : memref<1x8xf32, #tpu.memory_space<vmem>>, vector<1x8xf32>
    tpu.vector_store %arg4[%c0_30, %c0_31], %71 {strides = array<i32>} : memref<1x8xf32, #tpu.memory_space<vmem>>, vector<1x8xf32>,
    return
  }
}

</mosaic_0001>

<llo_original>
// kernel: tpu_custom_call.1
$region0: #{tpu_custom_call.1}
  #allocation0 [shape = 'u32[]', space=smem, size = 0x4, offset = 0x4, fixed_abs, tag = 'smem constant byte address 0x4 - core index']
  #allocation1 [shape = 'u32[72,128]{1,0:T(1,128)}', space=vmem, size = 0x9000, scoped, tag = 'internal scratch']
  %s0 = inlined_call_operand.hbm [shape: f32[8,128], index: 0, kind: input, shape index: {}]
  %s1 = inlined_call_operand.hbm [shape: f32[128,256], index: 1, kind: input, shape index: {}]
  %s2 = inlined_call_operand.hbm [shape: f32[256,128], index: 2, kind: input, shape index: {}]
  %s3 = inlined_call_operand.hbm [shape: f32[1,1281], index: 3, kind: input, shape index: {}]
  %s4 = inlined_call_operand.hbm [shape: f32[1,8], index: 4, kind: output, shape index: {}]
  %s5 = sld [smem:[#allocation0]]
  $region42: #{tpu_custom_call.1} parent=0
    _
  %s7 = ssub.s32 1, %s5
  %s8 = scalar_select 0, %s7, %s5
  $region1: #{tpu_custom_call.1} parent=0
    #allocation2 [shape = 'u8[4096]{0}', space=vmem, size = 0x1000, scoped, tag = 'input window, operand 0, single buffered']
    #allocation3 [shape = 's32[1]{0}', space=sflag, size = 0x4, scoped, tag = 'scoped memory for tpu_custom_call.1']
    #allocation4 [shape = 's32[1]{0}', space=sflag, size = 0x4, scoped, tag = 'scoped memory for tpu_custom_call.1']
    #allocation5 [shape = 'u8[131072]{0}', space=vmem, size = 0x20000, scoped, tag = 'input window, operand 1, single buffered']
    #allocation6 [shape = 's32[1]{0}', space=sflag, size = 0x4, scoped, tag = 'scoped memory for tpu_custom_call.1']
    #allocation7 [shape = 'u8[131072]{0}', space=vmem, size = 0x20000, scoped, tag = 'input window, operand 2, single buffered']
    #allocation8 [shape = 'u8[5632]{0}', space=vmem, size = 0x1800, scoped, tag = 'input window, operand 3, single buffered']
    #allocation9 [shape = 's32[1]{0}', space=sflag, size = 0x4, scoped, tag = 'scoped memory for tpu_custom_call.1']
    #allocation10 [shape = 'u8[512]{0}', space=vmem, size = 0x400, scoped, tag = 'output window, operand 0, single buffered']
    %9 = vsyncpa [#allocation3], 0
    %10 = vsyncpa [#allocation6], 0
    %11 = vsyncpa [#allocation9], 0
    %12 = vsyncpa [#allocation4], 0
    // Predicated region
    $region2: #{tpu_custom_call.1} parent=1 // pred_check
      _
    $region3: #{tpu_custom_call.1} parent=1 // pred_check_branch
      %14 = sbr.rel (0) target = $region5
    $region4: #{tpu_custom_call.1} parent=1 // pred_region
      %16 = vsyncadd [#allocation3], 0
      %s18 = sshll.u32 %s0, 4
      %s19 = int_to_ptr.hbm [resolvable:$true] %s18
      %s20 = sshll.u32 [#allocation2], 4
      %s21 = int_to_ptr.vmem [resolvable:$true] %s20
      %23 = dma.hbm_to_vmem [thread:$0]  %s19, 128, %s21, [#allocation3]
    $region5: #{tpu_custom_call.1} parent=1 // pred_fallthru
      _
    // Predicated region
    $region6: #{tpu_custom_call.1} parent=1 // pred_check
      _
    $region7: #{tpu_custom_call.1} parent=1 // pred_check_branch
      %25 = sbr.rel (0) target = $region9
    $region8: #{tpu_custom_call.1} parent=1 // pred_region
      %27 = vsyncadd [#allocation6], 0
      %s28 = sshll.u32 %s1, 4
      %s29 = int_to_ptr.hbm [resolvable:$true] %s28
      %s30 = sshll.u32 [#allocation5], 4
      %s31 = int_to_ptr.vmem [resolvable:$true] %s30
      %36 = dma.hbm_to_vmem [thread:$0]  %s29, 4096, %s31, [#allocation6], 256, 256, 16
    $region9: #{tpu_custom_call.1} parent=1 // pred_fallthru
      _
    // Predicated region
    $region10: #{tpu_custom_call.1} parent=1 // pred_check
      _
    $region11: #{tpu_custom_call.1} parent=1 // pred_check_branch
      %38 = sbr.rel (0) target = $region13
    $region12: #{tpu_custom_call.1} parent=1 // pred_region
      %40 = vsyncadd [#allocation6], 0
      %s41 = sshll.u32 %s2, 4
      %s42 = int_to_ptr.hbm [resolvable:$true] %s41
      %s43 = sshll.u32 [#allocation7], 4
      %s44 = int_to_ptr.vmem [resolvable:$true] %s43
      %49 = dma.hbm_to_vmem [thread:$0]  %s42, 4096, %s44, [#allocation6], 128, 128, 8
    $region13: #{tpu_custom_call.1} parent=1 // pred_fallthru
      _
    // Predicated region
    $region14: #{tpu_custom_call.1} parent=1 // pred_check
      _
    $region15: #{tpu_custom_call.1} parent=1 // pred_check_branch
      %51 = sbr.rel (0) target = $region17
    $region16: #{tpu_custom_call.1} parent=1 // pred_region
      %53 = vsyncadd [#allocation9], 0
      %s55 = sshll.u32 %s3, 4
      %s56 = int_to_ptr.hbm [resolvable:$true] %s55
      %s57 = sshll.u32 [#allocation8], 4
      %s58 = int_to_ptr.vmem [resolvable:$true] %s57
      %60 = dma.hbm_to_vmem [thread:$0]  %s56, 176, %s58, [#allocation9]
    $region17: #{tpu_custom_call.1} parent=1 // pred_fallthru
      _
    // Predicated region
    $region18: #{tpu_custom_call.1} parent=1 // pred_check
      _
    $region19: #{tpu_custom_call.1} parent=1 // pred_check_branch
      %62 = sbr.rel (0) target = $region21
    $region20: #{tpu_custom_call.1} parent=1 // pred_region
      %64 = dma.done [#allocation3], 128
    $region21: #{tpu_custom_call.1} parent=1 // pred_fallthru
      _
    // Predicated region
    $region22: #{tpu_custom_call.1} parent=1 // pred_check
      _
    $region23: #{tpu_custom_call.1} parent=1 // pred_check_branch
      %66 = sbr.rel (0) target = $region25
    $region24: #{tpu_custom_call.1} parent=1 // pred_region
      %68 = dma.done [#allocation6], 4096
    $region25: #{tpu_custom_call.1} parent=1 // pred_fallthru
      _
    // Predicated region
    $region26: #{tpu_custom_call.1} parent=1 // pred_check
      _
    $region27: #{tpu_custom_call.1} parent=1 // pred_check_branch
      %70 = sbr.rel (0) target = $region29
    $region28: #{tpu_custom_call.1} parent=1 // pred_region
      %72 = dma.done [#allocation6], 4096
    $region29: #{tpu_custom_call.1} parent=1 // pred_fallthru
      _
    // Predicated region
    $region30: #{tpu_custom_call.1} parent=1 // pred_check
      _
    $region31: #{tpu_custom_call.1} parent=1 // pred_check_branch
      %74 = sbr.rel (0) target = $region33
    $region32: #{tpu_custom_call.1} parent=1 // pred_region
      %76 = dma.done [#allocation9], 176
    $region33: #{tpu_custom_call.1} parent=1 // pred_fallthru
      _
    %v77 = vld [vmem:[#allocation8] sm:$0x3]
    %v78 = vld [vmem:[#allocation8 + $0x2] sm:$0x3]
    %v79 = vld [vmem:[#allocation8 + $0x4] sm:$0x3]
    %v80 = vld [vmem:[#allocation8 + $0x6] sm:$0x1]
    %v81 = vld [vmem:[#allocation8 + $0x7] sm:$0x1]
    %v82 = vld [vmem:[#allocation8 + $0x8] sm:$0x1]
    %v83 = vld [vmem:[#allocation8 + $0x9] sm:$0x1]
    %v84 = vld [vmem:[#allocation8 + $0xa] sm:$0x1]
    %v85 = vld [vmem:[#allocation2] sm:$0xff]
    %v86 = vld [vmem:[#allocation5] sm:$0xff]
    %v87 = vld [vmem:[#allocation5 + $0x8] sm:$0xff]
    %v88 = vld [vmem:[#allocation5 + $0x10] sm:$0xff]
    %v89 = vld [vmem:[#allocation5 + $0x18] sm:$0xff]
    %v90 = vld [vmem:[#allocation5 + $0x20] sm:$0xff]
    %v91 = vld [vmem:[#allocation5 + $0x28] sm:$0xff]
    %v92 = vld [vmem:[#allocation5 + $0x30] sm:$0xff]
    %v93 = vld [vmem:[#allocation5 + $0x38] sm:$0xff]
    %v94 = vld [vmem:[#allocation5 + $0x40] sm:$0xff]
    %v95 = vld [vmem:[#allocation5 + $0x48] sm:$0xff]
    %v96 = vld [vmem:[#allocation5 + $0x50] sm:$0xff]
    %v97 = vld [vmem:[#allocation5 + $0x58] sm:$0xff]
    %v98 = vld [vmem:[#allocation5 + $0x60] sm:$0xff]
    %v99 = vld [vmem:[#allocation5 + $0x68] sm:$0xff]
    %v100 = vld [vmem:[#allocation5 + $0x70] sm:$0xff]
    %v101 = vld [vmem:[#allocation5 + $0x78] sm:$0xff]
    %v102 = vld [vmem:[#allocation5 + $0x80] sm:$0xff]
    %v103 = vld [vmem:[#allocation5 + $0x88] sm:$0xff]
    %v104 = vld [vmem:[#allocation5 + $0x90] sm:$0xff]
    %v105 = vld [vmem:[#allocation5 + $0x98] sm:$0xff]
    %v106 = vld [vmem:[#allocation5 + $0xa0] sm:$0xff]
    %v107 = vld [vmem:[#allocation5 + $0xa8] sm:$0xff]
    %v108 = vld [vmem:[#allocation5 + $0xb0] sm:$0xff]
    %v109 = vld [vmem:[#allocation5 + $0xb8] sm:$0xff]
    %v110 = vld [vmem:[#allocation5 + $0xc0] sm:$0xff]
    %v111 = vld [vmem:[#allocation5 + $0xc8] sm:$0xff]
    %v112 = vld [vmem:[#allocation5 + $0xd0] sm:$0xff]
    %v113 = vld [vmem:[#allocation5 + $0xd8] sm:$0xff]
    %v114 = vld [vmem:[#allocation5 + $0xe0] sm:$0xff]
    %v115 = vld [vmem:[#allocation5 + $0xe8] sm:$0xff]
    %v116 = vld [vmem:[#allocation5 + $0xf0] sm:$0xff]
    %v117 = vld [vmem:[#allocation5 + $0xf8] sm:$0xff]
    %v119 = vperm.slane %v77, 0
    %v120 = vperm.slane %v77, 1
    %123 = vmatpush.msra.mxu0 %v116
    %124 = vmatpush.msra.mxu0 %v114
    %125 = vmatpush.msra.mxu0 %v112
    %126 = vmatpush.msra.mxu0 %v110
    %127 = vmatpush.msra.mxu0 %v108
    %128 = vmatpush.msra.mxu0 %v106
    %129 = vmatpush.msra.mxu0 %v104
    %130 = vmatpush.msra.mxu0 %v102
    %131 = vmatpush.msra.mxu0 %v100
    %132 = vmatpush.msra.mxu0 %v98
    %133 = vmatpush.msra.mxu0 %v96
    %134 = vmatpush.msra.mxu0 %v94
    %135 = vmatpush.msra.mxu0 %v92
    %136 = vmatpush.msra.mxu0 %v90
    %137 = vmatpush.msra.mxu0 %v88
    %138 = vmatpush.msra.mxu0 %v86
    %139 = vmatmul.f32.gmra.mxu0 %v85
    %v140 = vpop.f32.mrf.mxu0
    %v141 = vadd.f32 %v119, %v140
    %142 = vdwg.mxu0
    %143 = vmatpush.msra.mxu0 %v117
    %144 = vmatpush.msra.mxu0 %v115
    %145 = vmatpush.msra.mxu0 %v113
    %146 = vmatpush.msra.mxu0 %v111
    %147 = vmatpush.msra.mxu0 %v109
    %148 = vmatpush.msra.mxu0 %v107
    %149 = vmatpush.msra.mxu0 %v105
    %150 = vmatpush.msra.mxu0 %v103
    %151 = vmatpush.msra.mxu0 %v101
    %152 = vmatpush.msra.mxu0 %v99
    %153 = vmatpush.msra.mxu0 %v97
    %154 = vmatpush.msra.mxu0 %v95
    %155 = vmatpush.msra.mxu0 %v93
    %156 = vmatpush.msra.mxu0 %v91
    %157 = vmatpush.msra.mxu0 %v89
    %158 = vmatpush.msra.mxu0 %v87
    %159 = vmatmul.f32.gmra.mxu0 %v85
    %v160 = vpop.f32.mrf.mxu0
    %v161 = vadd.f32 %v120, %v160
    %162 = vdwg.mxu0
    %v163 = vrot.slane %v141, 4
    %v164 = vadd.f32 %v141, %v163
    %v165 = vrot.slane %v164, 2
    %v166 = vadd.f32 %v164, %v165
    %v167 = vrot.slane %v166, 1
    %v168 = vadd.f32 %v166, %v167
    %v169 = vrot.slane %v161, 4
    %v170 = vadd.f32 %v161, %v169
    %v171 = vrot.slane %v170, 2
    %v172 = vadd.f32 %v170, %v171
    %v173 = vrot.slane %v172, 1
    %v174 = vadd.f32 %v172, %v173
    %v175 = vmul.f32 %v141, %v141
    %v176 = vmul.f32 %v161, %v161
    %v177 = vrot.slane %v175, 4
    %v178 = vadd.f32 %v175, %v177
    %v179 = vrot.slane %v178, 2
    %v180 = vadd.f32 %v178, %v179
    %v181 = vrot.slane %v180, 1
    %v182 = vadd.f32 %v180, %v181
    %v183 = vrot.slane %v176, 4
    %v184 = vadd.f32 %v176, %v183
    %v185 = vrot.slane %v184, 2
    %v186 = vadd.f32 %v184, %v185
    %v187 = vrot.slane %v186, 1
    %v188 = vadd.f32 %v186, %v187
    %v189 = vmul.f32 %v168, 0.125
    %v190 = vmul.f32 %v174, 0.125
    %v191 = vmul.f32 %v182, 0.125
    %v192 = vmul.f32 %v188, 0.125
    %v193 = vmul.f32 %v189, %v189
    %v194 = vmul.f32 %v190, %v190
    %v195 = vsub.f32 %v191, %v193
    %v196 = vsub.f32 %v192, %v194
    %v197 = vmax.f32 %v195, 0.0
    %v198 = vmax.f32 %v196, 0.0
    %v199 = vadd.f32 %v197, 1e-05
    %v200 = vadd.f32 %v198, 1e-05
    %v201 = vrsqrt.pop %v199
    %v202 = vmul.f32 %v201, %v199
    %v203 = vmul.f32 %v202, %v201
    %v204 = vmul.f32 0.5, %v203
    %v205 = vsub.f32 1.5, %v204
    %v206 = vmul.f32 %v201, %v205
    %vm207 = vweird.f32 %v199
    %vm208 = vweird.f32 %v201
    %vm209 = vmor %vm207, %vm208
    %v210 = vsel %vm209, %v201, %v206
    %v211 = vrsqrt.pop %v200
    %v212 = vmul.f32 %v211, %v200
    %v213 = vmul.f32 %v212, %v211
    %v214 = vmul.f32 0.5, %v213
    %v215 = vsub.f32 1.5, %v214
    %v216 = vmul.f32 %v211, %v215
    %vm217 = vweird.f32 %v200
    %vm218 = vweird.f32 %v211
    %vm219 = vmor %vm217, %vm218
    %v220 = vsel %vm219, %v211, %v216
    %v223 = vrot.slane %v220, 7
    %vm224 = vcmask 1040384
    %v225 = vsel %vm224, %v210, %v223
    %v227 = vmul.f32 %v78, %v225
    %v229 = vperm.slane %v227, 0
    %v230 = vperm.slane %v227, 1
    %v233 = vmul.f32 %v189, %v229
    %v234 = vmul.f32 %v190, %v230
    %v237 = vrot.slane %v234, 7
    %v238 = vsel %vm224, %v233, %v237
    %v240 = vsub.f32 %v79, %v238
    %v241 = vmul.f32 %v141, %v229
    %v242 = vmul.f32 %v161, %v230
    %v244 = vperm.slane %v240, 0
    %v245 = vperm.slane %v240, 1
    %v248 = vadd.f32 %v241, %v244
    %v249 = vadd.f32 %v242, %v245
    %v250 = vmul.f32 %v248, 0.01
    %v251 = vmul.f32 %v249, 0.01
    %v252 = vmax.f32 %v248, %v250
    %v253 = vmax.f32 %v249, %v251
    %v254 = vld [vmem:[#allocation7] sm:$0xff]
    %v255 = vld [vmem:[#allocation7 + $0x8] sm:$0xff]
    %v256 = vld [vmem:[#allocation7 + $0x10] sm:$0xff]
    %v257 = vld [vmem:[#allocation7 + $0x18] sm:$0xff]
    %v258 = vld [vmem:[#allocation7 + $0x20] sm:$0xff]
    %v259 = vld [vmem:[#allocation7 + $0x28] sm:$0xff]
    %v260 = vld [vmem:[#allocation7 + $0x30] sm:$0xff]
    %v261 = vld [vmem:[#allocation7 + $0x38] sm:$0xff]
    %v262 = vld [vmem:[#allocation7 + $0x40] sm:$0xff]
    %v263 = vld [vmem:[#allocation7 + $0x48] sm:$0xff]
    %v264 = vld [vmem:[#allocation7 + $0x50] sm:$0xff]
    %v265 = vld [vmem:[#allocation7 + $0x58] sm:$0xff]
    %v266 = vld [vmem:[#allocation7 + $0x60] sm:$0xff]
    %v267 = vld [vmem:[#allocation7 + $0x68] sm:$0xff]
    %v268 = vld [vmem:[#allocation7 + $0x70] sm:$0xff]
    %v269 = vld [vmem:[#allocation7 + $0x78] sm:$0xff]
    %v270 = vld [vmem:[#allocation7 + $0x80] sm:$0xff]
    %v271 = vld [vmem:[#allocation7 + $0x88] sm:$0xff]
    %v272 = vld [vmem:[#allocation7 + $0x90] sm:$0xff]
    %v273 = vld [vmem:[#allocation7 + $0x98] sm:$0xff]
    %v274 = vld [vmem:[#allocation7 + $0xa0] sm:$0xff]
    %v275 = vld [vmem:[#allocation7 + $0xa8] sm:$0xff]
    %v276 = vld [vmem:[#allocation7 + $0xb0] sm:$0xff]
    %v277 = vld [vmem:[#allocation7 + $0xb8] sm:$0xff]
    %v278 = vld [vmem:[#allocation7 + $0xc0] sm:$0xff]
    %v279 = vld [vmem:[#allocation7 + $0xc8] sm:$0xff]
    %v280 = vld [vmem:[#allocation7 + $0xd0] sm:$0xff]
    %v281 = vld [vmem:[#allocation7 + $0xd8] sm:$0xff]
    %v282 = vld [vmem:[#allocation7 + $0xe0] sm:$0xff]
    %v283 = vld [vmem:[#allocation7 + $0xe8] sm:$0xff]
    %v284 = vld [vmem:[#allocation7 + $0xf0] sm:$0xff]
    %v285 = vld [vmem:[#allocation7 + $0xf8] sm:$0xff]
    %v287 = vperm.slane %v80, 0
    %289 = vmatpush.msra.mxu0 %v269
    %290 = vmatpush.msra.mxu0 %v268
    %291 = vmatpush.msra.mxu0 %v267
    %292 = vmatpush.msra.mxu0 %v266
    %293 = vmatpush.msra.mxu0 %v265
    %294 = vmatpush.msra.mxu0 %v264
    %295 = vmatpush.msra.mxu0 %v263
    %296 = vmatpush.msra.mxu0 %v262
    %297 = vmatpush.msra.mxu0 %v261
    %298 = vmatpush.msra.mxu0 %v260
    %299 = vmatpush.msra.mxu0 %v259
    %300 = vmatpush.msra.mxu0 %v258
    %301 = vmatpush.msra.mxu0 %v257
    %302 = vmatpush.msra.mxu0 %v256
    %303 = vmatpush.msra.mxu0 %v255
    %304 = vmatpush.msra.mxu0 %v254
    %305 = vmatmul.f32.gmra.mxu0 %v252
    %v306 = vpop.f32.mrf.mxu0
    %v307 = vadd.f32 %v287, %v306
    %308 = vdwg.mxu0
    %309 = vmatpush.msra.mxu0 %v285
    %310 = vmatpush.msra.mxu0 %v284
    %311 = vmatpush.msra.mxu0 %v283
    %312 = vmatpush.msra.mxu0 %v282
    %313 = vmatpush.msra.mxu0 %v281
    %314 = vmatpush.msra.mxu0 %v280
    %315 = vmatpush.msra.mxu0 %v279
    %316 = vmatpush.msra.mxu0 %v278
    %317 = vmatpush.msra.mxu0 %v277
    %318 = vmatpush.msra.mxu0 %v276
    %319 = vmatpush.msra.mxu0 %v275
    %320 = vmatpush.msra.mxu0 %v274
    %321 = vmatpush.msra.mxu0 %v273
    %322 = vmatpush.msra.mxu0 %v272
    %323 = vmatpush.msra.mxu0 %v271
    %324 = vmatpush.msra.mxu0 %v270
    %325 = vmatmul.f32.gmra.mxu0 %v253
    %v326 = vpop.f32.mrf.mxu0
    %v327 = vadd.f32 %v307, %v326
    %328 = vdwg.mxu0
    %v329 = vrot.slane %v327, 4
    %v330 = vadd.f32 %v327, %v329
    %v331 = vrot.slane %v330, 2
    %v332 = vadd.f32 %v330, %v331
    %v333 = vrot.slane %v332, 1
    %v334 = vadd.f32 %v332, %v333
    %v335 = vmul.f32 %v327, %v327
    %v336 = vrot.slane %v335, 4
    %v337 = vadd.f32 %v335, %v336
    %v338 = vrot.slane %v337, 2
    %v339 = vadd.f32 %v337, %v338
    %v340 = vrot.slane %v339, 1
    %v341 = vadd.f32 %v339, %v340
    %v342 = vmul.f32 %v334, 0.125
    %v343 = vmul.f32 %v341, 0.125
    %v344 = vmul.f32 %v342, %v342
    %v345 = vsub.f32 %v343, %v344
    %v346 = vmax.f32 %v345, 0.0
    %v347 = vadd.f32 %v346, 1e-05
    %v348 = vrsqrt.pop %v347
    %v349 = vmul.f32 %v348, %v347
    %v350 = vmul.f32 %v349, %v348
    %v351 = vmul.f32 0.5, %v350
    %v352 = vsub.f32 1.5, %v351
    %v353 = vmul.f32 %v348, %v352
    %vm354 = vweird.f32 %v347
    %vm355 = vweird.f32 %v348
    %vm356 = vmor %vm354, %vm355
    %v357 = vsel %vm356, %v348, %v353
    %v358 = vmul.f32 %v81, %v357
    %v359 = vmul.f32 %v342, %v358
    %v360 = vsub.f32 %v82, %v359
    %v362 = vperm.slane %v358, 0
    %v364 = vmul.f32 %v327, %v362
    %v366 = vperm.slane %v360, 0
    %v368 = vadd.f32 %v364, %v366
    %v369 = vmul.f32 %v368, 0.01
    %v370 = vmax.f32 %v368, %v369
    %372 = vset.pattern.permute.xlu0 0
    %373 = vperm.xlu0 %372, %v84
    %v374 = vpop.permute.xlu0 %373
    %v376 = vperm.slane %v374, 0
    %377 = vmatpush.xpose.msra.mxu0 0.0
    %378 = vmatpush.xpose.msra.mxu0 0.0
    %379 = vmatpush.xpose.msra.mxu0 0.0
    %380 = vmatpush.xpose.msra.mxu0 0.0
    %381 = vmatpush.xpose.msra.mxu0 0.0
    %382 = vmatpush.xpose.msra.mxu0 0.0
    %383 = vmatpush.xpose.msra.mxu0 0.0
    %384 = vmatpush.xpose.msra.mxu0 0.0
    %385 = vmatpush.xpose.msra.mxu0 0.0
    %386 = vmatpush.xpose.msra.mxu0 0.0
    %387 = vmatpush.xpose.msra.mxu0 0.0
    %388 = vmatpush.xpose.msra.mxu0 0.0
    %389 = vmatpush.xpose.msra.mxu0 0.0
    %390 = vmatpush.xpose.msra.mxu0 0.0
    %391 = vmatpush.xpose.msra.mxu0 0.0
    %392 = vmatpush.xpose.msra.mxu0 %v370
    %393 = vmatmul.f32.gmra.mxu0 %v83
    %v394 = vpop.f32.mrf.mxu0
    %v395 = vadd.f32 %v376, %v394
    %396 = vdwg.mxu0
    %vm397 = vcmask 57344
    %398 = vst.msk [vmem:[#allocation10] sm:$0x1] %vm397, %v395
    // Predicated region
    $region34: #{tpu_custom_call.1} parent=1 // pred_check
      _
    $region35: #{tpu_custom_call.1} parent=1 // pred_check_branch
      %400 = sbr.rel (0) target = $region37
    $region36: #{tpu_custom_call.1} parent=1 // pred_region
      %402 = vsyncadd [#allocation4], 0
      %s404 = sshll.u32 [#allocation10], 4
      %s405 = int_to_ptr.vmem [resolvable:$true] %s404
      %s406 = sshll.u32 %s4, 4
      %s407 = int_to_ptr.hbm [resolvable:$true] %s406
      %409 = dma.vmem_to_hbm [thread:$0]  %s405, 16, %s407, [#allocation4]
    $region37: #{tpu_custom_call.1} parent=1 // pred_fallthru
      _
    // Predicated region
    $region38: #{tpu_custom_call.1} parent=1 // pred_check
      _
    $region39: #{tpu_custom_call.1} parent=1 // pred_check_branch
      %411 = sbr.rel (0) target = $region41
    $region40: #{tpu_custom_call.1} parent=1 // pred_region
      %413 = dma.done [#allocation4], 16
    $region41: #{tpu_custom_call.1} parent=1 // pred_fallthru
      _
    %414 = vsyncpa [#allocation3], 1
    %415 = vsyncpa [#allocation6], 1
    %416 = vsyncpa [#allocation9], 1
    %417 = vsyncpa [#allocation4], 1

</llo_original>
